<compile_context>
chip_gen: v7x
topology: tpu7x:2x2x1
jax: 0.10.0
libtpu: 0.0.40
codegen_flags: <defaults>
</compile_context>

<pallas_src>
import jax
import jax.numpy as jnp
from jax.experimental import pallas as pl
from jax.experimental.pallas import tpu as pltpu


def _round_up(a: int, b: int) -> int:
    return (a + b - 1) // b * b


def _vib_kernel(x_ref, eps_ref, w_ref, b_ref, mu_ref, std_ref, enc_ref):
    h = mu_ref.shape[-1]                      # padded hidden width (static)
    x = x_ref[...]

    # One fused MXU matmul: columns [0:h) are the mu head, [h:2h) the std head.
    y = jnp.dot(x, w_ref[...], preferred_element_type=jnp.float32) + b_ref[...]
    mu = y[:, :h]
    pre = y[:, h:]                            # bias already includes the "-5"

    # softplus, numerically stable: max(t, 0) + log(1 + exp(-|t|)).
    # (log(1+z) instead of log1p: guaranteed Mosaic lowering; accuracy loss is
    #  negligible for this use.)
    std = jnp.maximum(pre, 0.0) + jnp.log(1.0 + jnp.exp(-jnp.abs(pre)))

    mu_ref[...] = mu.astype(mu_ref.dtype)
    std_ref[...] = std.astype(std_ref.dtype)
    enc_ref[...] = (mu + eps_ref[...] * std).astype(enc_ref.dtype)


def _const_spec(shape):
    """BlockSpec for a grid-invariant operand (single-buffered when supported)."""
    index_map = lambda i: (0,) * len(shape)
    try:
        return pl.BlockSpec(shape, index_map, pipeline_mode=pl.Buffered(1))
    except TypeError:  # older JAX without pipeline_mode: default double-buffering
        return pl.BlockSpec(shape, index_map)


def vib_forward(x, params, *, key=None, eps=None, num_sample=1,
                block_rows=512, out_dtype=jnp.float32):
    """Pallas TPU forward of VIB. Returns ((mu, std), encoding)."""
    orig_shape = x.shape
    hidden = orig_shape[-1]
    n = 1
    for s in orig_shape[:-1]:
        n *= s
    x2 = x.reshape(n, hidden).astype(jnp.float32)

    h_pad = _round_up(hidden, 128)
    dh = h_pad - hidden

    # ---- reparametrization noise (wrapper-side; the on-chip TPU PRNG
    #      primitives do not lower in interpret mode). ------------------------
    if eps is None:
        key = jax.random.PRNGKey(0) if key is None else key
        if num_sample == 1:
            eps2 = jax.random.normal(key, (n, h_pad), jnp.float32)
        else:
            # mean_s(mu + eps_s * std) == mu + mean(eps_s) * std
            eps2 = jax.random.normal(key, (num_sample, n, h_pad), jnp.float32).mean(0)
    else:
        eps2 = jnp.asarray(eps, jnp.float32)
        if eps2.ndim == len(orig_shape) + 1:      # per-sample noise provided
            eps2 = eps2.mean(0)
        eps2 = eps2.reshape(n, hidden)
        if dh:
            eps2 = jnp.pad(eps2, ((0, 0), (0, dh)))

    # ---- feature padding only when hidden is not lane-aligned ---------------
    if dh:
        x2 = jnp.pad(x2, ((0, 0), (0, dh)))

    def _prep_w(w):  # torch Linear weight [out, in] -> [in, out], zero-padded
        w = jnp.asarray(w, jnp.float32).T
        return jnp.pad(w, ((0, dh), (0, dh))) if dh else w

    def _prep_b(b, shift=0.0):
        b = jnp.asarray(b, jnp.float32) + shift
        return jnp.pad(b, (0, dh)) if dh else b

    w_cat = jnp.concatenate([_prep_w(params["mu_w"]), _prep_w(params["std_w"])],
                            axis=1)                              # [Hp, 2*Hp]
    b_cat = jnp.concatenate([_prep_b(params["mu_b"]),
                             _prep_b(params["std_b"], shift=-5.0)]
                            ).reshape(1, 2 * h_pad)              # [1, 2*Hp]

    # ---- row tiling ----------------------------------------------------------
    tb = min(block_rows, _round_up(n, 8))
    if pl.cdiv(n, tb) < 2 and n > 8:          # give the 2nd v7x TensorCore work
        tb = _round_up((n + 1) // 2, 8)

    out_bytes = jnp.dtype(out_dtype).itemsize
    w_bytes = h_pad * 2 * h_pad * 4 + 2 * h_pad * 4

    def _budget(t):  # single-buffered W/b, double-buffered row streams
        return w_bytes + 2 * 2 * (t * h_pad * 4) + 2 * 3 * (t * h_pad * out_bytes)

    while tb > 8 and _budget(tb) > 48 * 1024 * 1024:   # keep v7x (64 MiB) safe
        tb = max(8, _round_up(tb // 2, 8))

    grid = (pl.cdiv(n, tb),)
    vmem_limit = int(min(max(2 * _budget(tb), 32 * 1024 * 1024),
                         64 * 1024 * 1024))

    row_spec = lambda: pl.BlockSpec((tb, h_pad), lambda i: (i, 0))
    w_spec = _const_spec((h_pad, 2 * h_pad))
    b_spec = _const_spec((1, 2 * h_pad))

    cost = pl.CostEstimate(
        flops=4 * n * h_pad * h_pad,
        transcendentals=2 * n * h_pad,
        bytes_accessed=(2 * 4 + 3 * out_bytes) * n * h_pad + w_bytes)

    out_shape = tuple(jax.ShapeDtypeStruct((n, h_pad), out_dtype) for _ in range(3))

    mu, std, enc = pl.pallas_call(
        _vib_kernel,
        out_shape=out_shape,
        grid=grid,
        in_specs=[row_spec(), row_spec(), w_spec, b_spec],
        out_specs=(row_spec(), row_spec(), row_spec()),
        compiler_params=pltpu.CompilerParams(
            dimension_semantics=("parallel",),
            vmem_limit_bytes=vmem_limit),
        cost_estimate=cost,
    )(x2, eps2, w_cat, b_cat)

    if dh:
        mu, std, enc = (a[:, :hidden] for a in (mu, std, enc))
    mu = mu.reshape(orig_shape)
    std = std.reshape(orig_shape)
    enc = enc.reshape(orig_shape)
    return (mu, std), enc


if __name__ == "__main__":
    batch, seq, hidden = 2, 8, 32

    key = jax.random.PRNGKey(0)
    kx, k1, k2, k3, k4, keps = jax.random.split(key, 6)
    params = {
        "mu_w":  0.1 * jax.random.normal(k1, (hidden, hidden), jnp.float32),
        "mu_b":  0.1 * jax.random.normal(k2, (hidden,), jnp.float32),
        "std_w": 0.1 * jax.random.normal(k3, (hidden, hidden), jnp.float32),
        "std_b": 0.1 * jax.random.normal(k4, (hidden,), jnp.float32),
    }
    x = jax.random.normal(kx, (batch, seq, hidden), jnp.float32)
    eps = jax.random.normal(keps, (batch, seq, hidden), jnp.float32)

    (mu, std), enc = vib_forward(x, params, eps=eps)
    for a in (mu, std, enc):
        jax.block_until_ready(a)

    # Pure-JAX reference of the PyTorch module.
    hp = jax.lax.Precision.HIGHEST
    mu_ref = jnp.dot(x, params["mu_w"].T, precision=hp) + params["mu_b"]
    std_ref = jax.nn.softplus(
        jnp.dot(x, params["std_w"].T, precision=hp) + params["std_b"] - 5.0)
    enc_ref = mu_ref + eps * std_ref

    assert mu.shape == (batch, seq, hidden)
    assert std.shape == (batch, seq, hidden)
    assert enc.shape == (batch, seq, hidden)
    assert jnp.allclose(mu, mu_ref, atol=2e-3, rtol=2e-3), "mu mismatch"
    assert jnp.allclose(std, std_ref, atol=2e-3, rtol=2e-3), "std mismatch"
    assert jnp.allclose(enc, enc_ref, atol=2e-3, rtol=2e-3), "encoding mismatch"
    assert bool(jnp.all(jnp.isfinite(enc))), "non-finite encoding"

    print("KERNEL_OK")
</pallas_src>

<mosaic_0001>
module attributes {stable_mosaic.version = 11 : i64} {
  func.func @_vib_kernel(%arg0: i32, %arg1: memref<8x128xf32, #tpu.memory_space<vmem>>, %arg2: memref<8x128xf32, #tpu.memory_space<vmem>>, %arg3: memref<128x256xf32, #tpu.memory_space<vmem>>, %arg4: memref<1x256xf32, #tpu.memory_space<vmem>>, %arg5: memref<8x128xf32, #tpu.memory_space<vmem>>, %arg6: memref<8x128xf32, #tpu.memory_space<vmem>>, %arg7: memref<8x128xf32, #tpu.memory_space<vmem>>) attributes {dimension_semantics = [#tpu.dimension_semantics<parallel>], iteration_bounds = array<i64: 2>, scalar_prefetch = 0 : i64, scratch_operands = 0 : i64, tpu.core_type = #tpu.core_type<tc>, window_params = [{transform_indices = @transform_0, window_bounds = array<i64: 8, 128>}, {transform_indices = @transform_1, window_bounds = array<i64: 8, 128>}, {pipeline_mode = #tpu.pipeline_mode<synchronous>, transform_indices = @transform_2, window_bounds = array<i64: 128, 256>}, {pipeline_mode = #tpu.pipeline_mode<synchronous>, transform_indices = @transform_3, window_bounds = array<i64: 1, 256>}, {transform_indices = @transform_4, window_bounds = array<i64: 8, 128>}, {transform_indices = @transform_5, window_bounds = array<i64: 8, 128>}, {transform_indices = @transform_6, window_bounds = array<i64: 8, 128>}]} {
    %c0 = arith.constant 0 : index
    %c0_0 = arith.constant 0 : index
    %0 = vector.load %arg1[%c0, %c0_0] : memref<8x128xf32, #tpu.memory_space<vmem>>, vector<8x128xf32>
    %c0_1 = arith.constant 0 : index
    %c0_2 = arith.constant 0 : index
    %1 = vector.load %arg3[%c0_1, %c0_2] : memref<128x256xf32, #tpu.memory_space<vmem>>, vector<128x256xf32>
    %cst = arith.constant dense<0.000000e+00> : vector<8x256xf32>
    %2 = tpu.matmul %0, %1, %cst {dimension_numbers = #tpu.dot_dimension_numbers<[1], [0], [0], [1], [0, 0, 1, 1], [], []>} : vector<8x128xf32>, vector<128x256xf32>, vector<8x256xf32> -> vector<8x256xf32>
    %c0_3 = arith.constant 0 : index
    %c0_4 = arith.constant 0 : index
    %3 = vector.load %arg4[%c0_3, %c0_4] : memref<1x256xf32, #tpu.memory_space<vmem>>, vector<1x256xf32>
    %4 = vector.broadcast %3 : vector<1x256xf32> to vector<8x256xf32>
    %5 = arith.addf %2, %4 : vector<8x256xf32>
    %6 = vector.extract_strided_slice %5 {offsets = [0, 0], sizes = [8, 128], strides = [1, 1]} : vector<8x256xf32> to vector<8x128xf32>
    %7 = vector.extract_strided_slice %5 {offsets = [0, 128], sizes = [8, 128], strides = [1, 1]} : vector<8x256xf32> to vector<8x128xf32>
    %cst_5 = arith.constant 0.000000e+00 : f32
    %8 = vector.broadcast %cst_5 : f32 to vector<8x128xf32>
    %9 = arith.maximumf %7, %8 : vector<8x128xf32>
    %10 = math.absf %7 : vector<8x128xf32>
    %cst_6 = arith.constant 0.000000e+00 : f32
    %11 = vector.broadcast %cst_6 : f32 to vector<8x128xf32>
    %12 = arith.subf %11, %10 : vector<8x128xf32>
    %13 = math.exp %12 : vector<8x128xf32>
    %cst_7 = arith.constant 1.000000e+00 : f32
    %14 = vector.broadcast %cst_7 : f32 to vector<8x128xf32>
    %15 = arith.addf %14, %13 : vector<8x128xf32>
    %16 = math.log %15 : vector<8x128xf32>
    %17 = arith.addf %9, %16 : vector<8x128xf32>
    %c0_8 = arith.constant 0 : index
    %c0_9 = arith.constant 0 : index
    %18 = vector.load %arg5[%c0_8, %c0_9] : memref<8x128xf32, #tpu.memory_space<vmem>>, vector<8x128xf32>
    tpu.vector_store %arg5[%c0_8, %c0_9], %6 {strides = array<i32>} : memref<8x128xf32, #tpu.memory_space<vmem>>, vector<8x128xf32>,
    %c0_10 = arith.constant 0 : index
    %c0_11 = arith.constant 0 : index
    %19 = vector.load %arg6[%c0_10, %c0_11] : memref<8x128xf32, #tpu.memory_space<vmem>>, vector<8x128xf32>
    tpu.vector_store %arg6[%c0_10, %c0_11], %17 {strides = array<i32>} : memref<8x128xf32, #tpu.memory_space<vmem>>, vector<8x128xf32>,
    %c0_12 = arith.constant 0 : index
    %c0_13 = arith.constant 0 : index
    %20 = vector.load %arg2[%c0_12, %c0_13] : memref<8x128xf32, #tpu.memory_space<vmem>>, vector<8x128xf32>
    %21 = arith.mulf %20, %17 : vector<8x128xf32>
    %22 = arith.addf %6, %21 : vector<8x128xf32>
    %c0_14 = arith.constant 0 : index
    %c0_15 = arith.constant 0 : index
    %23 = vector.load %arg7[%c0_14, %c0_15] : memref<8x128xf32, #tpu.memory_space<vmem>>, vector<8x128xf32>
    tpu.vector_store %arg7[%c0_14, %c0_15], %22 {strides = array<i32>} : memref<8x128xf32, #tpu.memory_space<vmem>>, vector<8x128xf32>,
    return
  }
  func.func @transform_0(%arg0: i32) -> (i32, i32) {
    %c0_i32 = arith.constant 0 : i32
    %c0_i32_0 = arith.constant 0 : i32
    return %arg0, %c0_i32 : i32, i32
  }
  func.func @transform_1(%arg0: i32) -> (i32, i32) {
    %c0_i32 = arith.constant 0 : i32
    %c0_i32_0 = arith.constant 0 : i32
    return %arg0, %c0_i32 : i32, i32
  }
  func.func @transform_2(%arg0: i32) -> (i32, i32) {
    %c0_i32 = arith.constant 0 : i32
    %c0_i32_0 = arith.constant 0 : i32
    %c0_i32_1 = arith.constant 0 : i32
    return %c0_i32, %c0_i32_0 : i32, i32
  }
  func.func @transform_3(%arg0: i32) -> (i32, i32) {
    %c0_i32 = arith.constant 0 : i32
    %c0_i32_0 = arith.constant 0 : i32
    %c0_i32_1 = arith.constant 0 : i32
    return %c0_i32, %c0_i32_0 : i32, i32
  }
  func.func @transform_4(%arg0: i32) -> (i32, i32) {
    %c0_i32 = arith.constant 0 : i32
    %c0_i32_0 = arith.constant 0 : i32
    return %arg0, %c0_i32 : i32, i32
  }
  func.func @transform_5(%arg0: i32) -> (i32, i32) {
    %c0_i32 = arith.constant 0 : i32
    %c0_i32_0 = arith.constant 0 : i32
    return %arg0, %c0_i32 : i32, i32
  }
  func.func @transform_6(%arg0: i32) -> (i32, i32) {
    %c0_i32 = arith.constant 0 : i32
    %c0_i32_0 = arith.constant 0 : i32
    return %arg0, %c0_i32 : i32, i32
  }
}

</mosaic_0001>

<llo_original>
// kernel: tpu_custom_call.1
$region0: #{tpu_custom_call.1}
  #allocation0 [shape = 'u32[]', space=smem, size = 0x4, offset = 0x4, fixed_abs, tag = 'smem constant byte address 0x4 - core index']
  #allocation1 [shape = 'u32[144,128]{1,0:T(1,128)}', space=vmem, size = 0x12000, scoped, tag = 'internal scratch']
  %s0 = inlined_call_operand.hbm [shape: f32[16,128], index: 0, kind: input, shape index: {}]
  %s1 = inlined_call_operand.hbm [shape: f32[16,128], index: 1, kind: input, shape index: {}]
  %s2 = inlined_call_operand.hbm [shape: f32[128,256], index: 2, kind: input, shape index: {}]
  %s3 = inlined_call_operand.vmem [shape: f32[1,256], index: 3, kind: input, shape index: {}]
  %s4 = inlined_call_operand.hbm [shape: f32[16,128], index: 4, kind: output, shape index: {0}]
  %s5 = inlined_call_operand.hbm [shape: f32[16,128], index: 5, kind: output, shape index: {1}]
  %s6 = inlined_call_operand.hbm [shape: f32[16,128], index: 6, kind: output, shape index: {2}]
  %7 = xla_tuple %s4, %s5, %s6
  %s8 = sld [smem:[#allocation0]]
  $region77: #{tpu_custom_call.1} parent=0
    _
  %s10 = ssub.s32 1, %s8
  %s11 = scalar_select 0, %s10, %s8
  $region1: #{tpu_custom_call.1} parent=0
    #allocation2 [shape = 'u8[8192]{0}', space=vmem, size = 0x2000, scoped, tag = 'input window, operand 0']
    #allocation3 [shape = 's32[2]{0}', space=sflag, size = 0x8, scoped, tag = 'scoped memory for tpu_custom_call.1']
    #allocation4 [shape = 's32[2]{0}', space=sflag, size = 0x8, scoped, tag = 'scoped memory for tpu_custom_call.1']
    #allocation5 [shape = 'u8[8192]{0}', space=vmem, size = 0x2000, scoped, tag = 'input window, operand 1']
    #allocation6 [shape = 's32[2]{0}', space=sflag, size = 0x8, scoped, tag = 'scoped memory for tpu_custom_call.1']
    #allocation7 [shape = 'u8[131072]{0}', space=vmem, size = 0x20000, scoped, tag = 'input window, operand 2, single buffered']
    #allocation8 [shape = 'u8[8192]{0}', space=vmem, size = 0x2000, scoped, tag = 'output window, operand 0']
    #allocation9 [shape = 'u8[8192]{0}', space=vmem, size = 0x2000, scoped, tag = 'output window, operand 1']
    #allocation10 [shape = 's32[2]{0}', space=sflag, size = 0x8, scoped, tag = 'scoped memory for tpu_custom_call.1']
    #allocation11 [shape = 'u8[8192]{0}', space=vmem, size = 0x2000, scoped, tag = 'output window, operand 2']
    %12 = vsyncpa [#allocation3], 0
    %s13 = scalar_lea.sflag [#allocation3], 1
    %14 = vsyncpa %s13, 0
    %15 = vsyncpa [#allocation6], 0
    %s16 = scalar_lea.sflag [#allocation6], 1
    %17 = vsyncpa %s16, 0
    %18 = vsyncpa [#allocation4], 0
    %s19 = scalar_lea.sflag [#allocation4], 1
    %20 = vsyncpa %s19, 0
    %21 = vsyncpa [#allocation10], 0
    %s22 = scalar_lea.sflag [#allocation10], 1
    %23 = vsyncpa %s22, 0
    loop: start=0, step=1, limit=4
    $region2: #{tpu_custom_call.1} parent=1 // loop_pre_header
      _
    $region3: #{tpu_custom_call.1} parent=1 // loop_header
      %s25 = sphi 0, %s29
      %p26 = scmp.ge.s32.totalorder %s25, 4
      %s35 = sphi 0, %s37
      %s38 = sphi 0, %s35
      %s39 = sphi 0, %s38
      %s55 = sphi 0, %s39
      %s61 = sphi 0, %s63
      %s64 = sphi 0, %s61
      %s65 = sphi 0, %s64
      %s81 = sphi 0, %s65
      %s85 = sphi 0, %s85
      %s87 = sphi 0, %s85
      %s88 = sphi 0, %s87
      %s102 = sphi 0, %s88
      %s106 = sphi 0, %s106
      %s108 = sphi 0, %s106
      %s109 = sphi 0, %s108
      %s123 = sphi 0, %s109
      %s129 = sphi 0, %s131
      %s132 = sphi 0, %s129
      %s133 = sphi 0, %s132
      %s149 = sphi 0, %s133
      %s155 = sphi 0, %s157
      %s158 = sphi 0, %s155
      %s159 = sphi 0, %s158
      %s175 = sphi 0, %s159
      %s181 = sphi 0, %s183
      %s184 = sphi 0, %s181
      %s185 = sphi 0, %s184
      %s201 = sphi 0, %s185
    $region4: #{tpu_custom_call.1} parent=1 // loop_header_branch
      %28 = sbr.rel (%p26) target = $region8
    $region5: #{tpu_custom_call.1} parent=1 // loop_body
      %s30 = ssub.s32 %s25, 1
      %s31 = ssub.s32 %s25, 2
      %s32 = sadd.s32 %s25, 1
      %s33 = ssub.s32 %s25, %s32
      %p34 = scmp.eq.s32.totalorder %s33, 0
      %s36 = sadd.s32 %s35, 1
      %s37 = scalar_select %p34, %s35, %s36
      %p40 = pneg %p34
      %p41 = scmp.eq.s32.totalorder %s25, 1
      %p42 = por %p40, %p41
      %p43 = scmp.ne.s32.totalorder %s35, %s38
      %p44 = scmp.eq.s32.totalorder %s25, 0
      %p45 = por %p43, %p44
      %p46 = scmp.ne.s32.totalorder %s35, %s38
      %p47 = scmp.eq.s32.totalorder %s30, 1
      %p48 = por %p46, %p47
      %p49 = scmp.ne.s32.totalorder %s38, %s39
      %p50 = scmp.eq.s32.totalorder %s30, 0
      %p51 = por %p49, %p50
      %p52 = scmp.ne.s32.totalorder %s38, %s39
      %p53 = scmp.eq.s32.totalorder %s31, 1
      %p54 = por %p52, %p53
      %p56 = scmp.ne.s32.totalorder %s39, %s55
      %p57 = scmp.eq.s32.totalorder %s31, 0
      %p58 = por %p56, %p57
      %s59 = ssub.s32 %s25, %s32
      %p60 = scmp.eq.s32.totalorder %s59, 0
      %s62 = sadd.s32 %s61, 1
      %s63 = scalar_select %p60, %s61, %s62
      %p66 = pneg %p60
      %p67 = scmp.eq.s32.totalorder %s25, 1
      %p68 = por %p66, %p67
      %p69 = scmp.ne.s32.totalorder %s61, %s64
      %p70 = scmp.eq.s32.totalorder %s25, 0
      %p71 = por %p69, %p70
      %p72 = scmp.ne.s32.totalorder %s61, %s64
      %p73 = scmp.eq.s32.totalorder %s30, 1
      %p74 = por %p72, %p73
      %p75 = scmp.ne.s32.totalorder %s64, %s65
      %p76 = scmp.eq.s32.totalorder %s30, 0
      %p77 = por %p75, %p76
      %p78 = scmp.ne.s32.totalorder %s64, %s65
      %p79 = scmp.eq.s32.totalorder %s31, 1
      %p80 = por %p78, %p79
      %p82 = scmp.ne.s32.totalorder %s65, %s81
      %p83 = scmp.eq.s32.totalorder %s31, 0
      %p84 = por %p82, %p83
      %s86 = sadd.s32 %s85, 1
      %p89 = scmp.eq.s32.totalorder %s25, 1
      %p90 = scmp.ne.s32.totalorder %s85, %s87
      %p91 = scmp.eq.s32.totalorder %s25, 0
      %p92 = por %p90, %p91
      %p93 = scmp.ne.s32.totalorder %s85, %s87
      %p94 = scmp.eq.s32.totalorder %s30, 1
      %p95 = por %p93, %p94
      %p96 = scmp.ne.s32.totalorder %s87, %s88
      %p97 = scmp.eq.s32.totalorder %s30, 0
      %p98 = por %p96, %p97
      %p99 = scmp.ne.s32.totalorder %s87, %s88
      %p100 = scmp.eq.s32.totalorder %s31, 1
      %p101 = por %p99, %p100
      %p103 = scmp.ne.s32.totalorder %s88, %s102
      %p104 = scmp.eq.s32.totalorder %s31, 0
      %p105 = por %p103, %p104
      %s107 = sadd.s32 %s106, 1
      %p110 = scmp.eq.s32.totalorder %s25, 1
      %p111 = scmp.ne.s32.totalorder %s106, %s108
      %p112 = scmp.eq.s32.totalorder %s25, 0
      %p113 = por %p111, %p112
      %p114 = scmp.ne.s32.totalorder %s106, %s108
      %p115 = scmp.eq.s32.totalorder %s30, 1
      %p116 = por %p114, %p115
      %p117 = scmp.ne.s32.totalorder %s108, %s109
      %p118 = scmp.eq.s32.totalorder %s30, 0
      %p119 = por %p117, %p118
      %p120 = scmp.ne.s32.totalorder %s108, %s109
      %p121 = scmp.eq.s32.totalorder %s31, 1
      %p122 = por %p120, %p121
      %p124 = scmp.ne.s32.totalorder %s109, %s123
      %p125 = scmp.eq.s32.totalorder %s31, 0
      %p126 = por %p124, %p125
      %s127 = ssub.s32 %s25, %s32
      %p128 = scmp.eq.s32.totalorder %s127, 0
      %s130 = sadd.s32 %s129, 1
      %s131 = scalar_select %p128, %s129, %s130
      %p134 = pneg %p128
      %p135 = scmp.eq.s32.totalorder %s25, 1
      %p136 = por %p134, %p135
      %p137 = scmp.ne.s32.totalorder %s129, %s132
      %p138 = scmp.eq.s32.totalorder %s25, 0
      %p139 = por %p137, %p138
      %p140 = scmp.ne.s32.totalorder %s129, %s132
      %p141 = scmp.eq.s32.totalorder %s30, 1
      %p142 = por %p140, %p141
      %p143 = scmp.ne.s32.totalorder %s132, %s133
      %p144 = scmp.eq.s32.totalorder %s30, 0
      %p145 = por %p143, %p144
      %p146 = scmp.ne.s32.totalorder %s132, %s133
      %p147 = scmp.eq.s32.totalorder %s31, 1
      %p148 = por %p146, %p147
      %p150 = scmp.ne.s32.totalorder %s133, %s149
      %p151 = scmp.eq.s32.totalorder %s31, 0
      %p152 = por %p150, %p151
      %s153 = ssub.s32 %s25, %s32
      %p154 = scmp.eq.s32.totalorder %s153, 0
      %s156 = sadd.s32 %s155, 1
      %s157 = scalar_select %p154, %s155, %s156
      %p160 = pneg %p154
      %p161 = scmp.eq.s32.totalorder %s25, 1
      %p162 = por %p160, %p161
      %p163 = scmp.ne.s32.totalorder %s155, %s158
      %p164 = scmp.eq.s32.totalorder %s25, 0
      %p165 = por %p163, %p164
      %p166 = scmp.ne.s32.totalorder %s155, %s158
      %p167 = scmp.eq.s32.totalorder %s30, 1
      %p168 = por %p166, %p167
      %p169 = scmp.ne.s32.totalorder %s158, %s159
      %p170 = scmp.eq.s32.totalorder %s30, 0
      %p171 = por %p169, %p170
      %p172 = scmp.ne.s32.totalorder %s158, %s159
      %p173 = scmp.eq.s32.totalorder %s31, 1
      %p174 = por %p172, %p173
      %p176 = scmp.ne.s32.totalorder %s159, %s175
      %p177 = scmp.eq.s32.totalorder %s31, 0
      %p178 = por %p176, %p177
      %s179 = ssub.s32 %s25, %s32
      %p180 = scmp.eq.s32.totalorder %s179, 0
      %s182 = sadd.s32 %s181, 1
      %s183 = scalar_select %p180, %s181, %s182
      %p186 = pneg %p180
      %p187 = scmp.eq.s32.totalorder %s25, 1
      %p188 = por %p186, %p187
      %p189 = scmp.ne.s32.totalorder %s181, %s184
      %p190 = scmp.eq.s32.totalorder %s25, 0
      %p191 = por %p189, %p190
      %p192 = scmp.ne.s32.totalorder %s181, %s184
      %p193 = scmp.eq.s32.totalorder %s30, 1
      %p194 = por %p192, %p193
      %p195 = scmp.ne.s32.totalorder %s184, %s185
      %p196 = scmp.eq.s32.totalorder %s30, 0
      %p197 = por %p195, %p196
      %p198 = scmp.ne.s32.totalorder %s184, %s185
      %p199 = scmp.eq.s32.totalorder %s31, 1
      %p200 = por %p198, %p199
      %p202 = scmp.ne.s32.totalorder %s185, %s201
      %p203 = scmp.eq.s32.totalorder %s31, 0
      %p204 = por %p202, %p203
      %p205 = scmp.le.s32.totalorder 1, %s25
      %p206 = scmp.lt.s32.totalorder %s25, 3
      %p207 = pnand %p205, %p206
      %p208 = pneg %p207
      // Predicated region
      $region9: #{tpu_custom_call.1} parent=5 // pred_check
        _
      $region10: #{tpu_custom_call.1} parent=5 // pred_check_branch
        %210 = sbr.rel (%p207) target = $region12
      $region11: #{tpu_custom_call.1} parent=5 // pred_region
        %s211 = ssub.s32 %s25, 1
        // Predicated region
        $region13: #{tpu_custom_call.1} parent=11 // pred_check
          %p212 = pneg %p98
        $region14: #{tpu_custom_call.1} parent=11 // pred_check_branch
          %214 = sbr.rel (%p212) target = $region16
        $region15: #{tpu_custom_call.1} parent=11 // pred_region
          %s216 = ssub.s32 4096, 4096
          %217 = vsyncadd [#allocation6], %s216
          %s218 = sshll.u32 [#allocation7], 4
          %s219 = int_to_ptr.vmem [resolvable:$true] %s218
          %224 = dma.hbm_to_vmem [thread:$0]  %s2, 4096, %s219, [#allocation6], 256, 256, 16
        $region16: #{tpu_custom_call.1} parent=11 // pred_fallthru
          _
        // Predicated region
        $region17: #{tpu_custom_call.1} parent=11 // pred_check
          %p225 = pneg %p119
        $region18: #{tpu_custom_call.1} parent=11 // pred_check_branch
          %227 = sbr.rel (%p225) target = $region20
        $region19: #{tpu_custom_call.1} parent=11 // pred_region
          _
        $region20: #{tpu_custom_call.1} parent=11 // pred_fallthru
          _
      $region12: #{tpu_custom_call.1} parent=5 // pred_fallthru
        _
      %p228 = scmp.lt.s32.totalorder %s25, 2
      // Predicated region
      $region21: #{tpu_custom_call.1} parent=5 // pred_check
        %p229 = pneg %p228
      $region22: #{tpu_custom_call.1} parent=5 // pred_check_branch
        %231 = sbr.rel (%p229) target = $region24
      $region23: #{tpu_custom_call.1} parent=5 // pred_region
        // Predicated region
        $region25: #{tpu_custom_call.1} parent=23 // pred_check
          %p232 = pneg %p45
        $region26: #{tpu_custom_call.1} parent=23 // pred_check_branch
          %234 = sbr.rel (%p232) target = $region28
        $region27: #{tpu_custom_call.1} parent=23 // pred_region
          %s235 = sand.u32 %s35, 1
          %s236 = scalar_lea.sflag [#allocation3], %s235
          %s237 = sand.u32 %s35, 1
          %s238 = smul.addr %s237, 8
          %s239 = scalar_lea.vmem [#allocation2], %s238
          %s241 = ssub.s32 128, 128
          %242 = vsyncadd %s236, %s241
          %s243 = smul.addr %s25, 128
          %s244 = scalar_lea.hbm %s0, %s243
          %s246 = sshll.u32 %s239, 4
          %s247 = int_to_ptr.vmem [resolvable:$true] %s246
          %249 = dma.hbm_to_vmem [thread:$0]  %s244, 128, %s247, %s236
        $region28: #{tpu_custom_call.1} parent=23 // pred_fallthru
          _
        // Predicated region
        $region29: #{tpu_custom_call.1} parent=23 // pred_check
          %p250 = pneg %p71
        $region30: #{tpu_custom_call.1} parent=23 // pred_check_branch
          %252 = sbr.rel (%p250) target = $region32
        $region31: #{tpu_custom_call.1} parent=23 // pred_region
          %s253 = sand.u32 %s25, 1
          %s254 = scalar_lea.sflag [#allocation6], %s253
          %s255 = sand.u32 %s61, 1
          %s256 = smul.addr %s255, 8
          %s257 = scalar_lea.vmem [#allocation5], %s256
          %s259 = ssub.s32 128, 128
          %260 = vsyncadd %s254, %s259
          %s261 = smul.addr %s25, 128
          %s262 = scalar_lea.hbm %s1, %s261
          %s264 = sshll.u32 %s257, 4
          %s265 = int_to_ptr.vmem [resolvable:$true] %s264
          %267 = dma.hbm_to_vmem [thread:$0]  %s262, 128, %s265, %s254
        $region32: #{tpu_custom_call.1} parent=23 // pred_fallthru
          _
      $region24: #{tpu_custom_call.1} parent=5 // pred_fallthru
        _
      %p268 = scmp.le.s32.totalorder 1, %s25
      %p269 = scmp.lt.s32.totalorder %s25, 3
      %p270 = pnand %p268, %p269
      %p271 = pneg %p270
      // Predicated region
      $region33: #{tpu_custom_call.1} parent=5 // pred_check
        _
      $region34: #{tpu_custom_call.1} parent=5 // pred_check_branch
        %273 = sbr.rel (%p270) target = $region36
      $region35: #{tpu_custom_call.1} parent=5 // pred_region
        %s274 = ssub.s32 %s25, 1
        %s275 = sand.u32 %s38, 1
        %s276 = scalar_lea.sflag [#allocation3], %s275
        %s277 = sand.u32 %s38, 1
        %s278 = smul.addr %s277, 8
        %s279 = scalar_lea.vmem [#allocation2], %s278
        // Predicated region
        $region37: #{tpu_custom_call.1} parent=35 // pred_check
          %p280 = pneg %p51
        $region38: #{tpu_custom_call.1} parent=35 // pred_check_branch
          %282 = sbr.rel (%p280) target = $region40
        $region39: #{tpu_custom_call.1} parent=35 // pred_region
          %283 = dma.done %s276, 128
        $region40: #{tpu_custom_call.1} parent=35 // pred_fallthru
          _
        %s284 = sand.u32 %s30, 1
        %s285 = scalar_lea.sflag [#allocation6], %s284
        %s286 = sand.u32 %s64, 1
        %s287 = smul.addr %s286, 8
        %s288 = scalar_lea.vmem [#allocation5], %s287
        // Predicated region
        $region41: #{tpu_custom_call.1} parent=35 // pred_check
          %p289 = pneg %p77
        $region42: #{tpu_custom_call.1} parent=35 // pred_check_branch
          %291 = sbr.rel (%p289) target = $region44
        $region43: #{tpu_custom_call.1} parent=35 // pred_region
          %292 = dma.done %s285, 128
        $region44: #{tpu_custom_call.1} parent=35 // pred_fallthru
          _
        // Predicated region
        $region45: #{tpu_custom_call.1} parent=35 // pred_check
          %p293 = pneg %p98
        $region46: #{tpu_custom_call.1} parent=35 // pred_check_branch
          %295 = sbr.rel (%p293) target = $region48
        $region47: #{tpu_custom_call.1} parent=35 // pred_region
          %296 = dma.done [#allocation6], 4096
        $region48: #{tpu_custom_call.1} parent=35 // pred_fallthru
          _
        %s297 = sand.u32 %s38, 1
        %s298 = scalar_lea.sflag [#allocation3], %s297
        %s299 = sand.u32 %s38, 1
        %s300 = smul.addr %s299, 8
        %s301 = scalar_lea.vmem [#allocation2], %s300
        %p302 = pneg %p51
        %p303 = pneg %p48
        %s304 = sand.u32 %s30, 1
        %s305 = scalar_lea.sflag [#allocation6], %s304
        %s306 = sand.u32 %s64, 1
        %s307 = smul.addr %s306, 8
        %s308 = scalar_lea.vmem [#allocation5], %s307
        %p309 = pneg %p77
        %p310 = pneg %p74
        %p311 = pneg %p98
        %p312 = pneg %p95
        %p313 = pneg %p119
        %p314 = pneg %p116
        %p315 = pneg %p145
        %p316 = pneg %p142
        %s317 = sand.u32 %s132, 1
        %s318 = scalar_lea.sflag [#allocation4], %s317
        %s319 = sand.u32 %s132, 1
        %s320 = smul.addr %s319, 8
        %s321 = scalar_lea.vmem [#allocation8], %s320
        %p322 = pneg %p171
        %p323 = pneg %p168
        %s324 = sand.u32 %s30, 1
        %s325 = scalar_lea.sflag [#allocation10], %s324
        %s326 = sand.u32 %s158, 1
        %s327 = smul.addr %s326, 8
        %s328 = scalar_lea.vmem [#allocation9], %s327
        %p329 = pneg %p197
        %p330 = pneg %p194
        %s331 = sand.u32 %s30, 1
        %s332 = scalar_lea.sflag [#allocation10], %s331
        %s333 = sand.u32 %s184, 1
        %s334 = smul.addr %s333, 8
        %s335 = scalar_lea.vmem [#allocation11], %s334
        %v336 = vld [vmem:[%s279] sm:$0xff]
        %v337 = vld [vmem:[#allocation7] sm:$0xff]
        %v338 = vld [vmem:[#allocation7 + $0x8] sm:$0xff]
        %v339 = vld [vmem:[#allocation7 + $0x10] sm:$0xff]
        %v340 = vld [vmem:[#allocation7 + $0x18] sm:$0xff]
        %v341 = vld [vmem:[#allocation7 + $0x20] sm:$0xff]
        %v342 = vld [vmem:[#allocation7 + $0x28] sm:$0xff]
        %v343 = vld [vmem:[#allocation7 + $0x30] sm:$0xff]
        %v344 = vld [vmem:[#allocation7 + $0x38] sm:$0xff]
        %v345 = vld [vmem:[#allocation7 + $0x40] sm:$0xff]
        %v346 = vld [vmem:[#allocation7 + $0x48] sm:$0xff]
        %v347 = vld [vmem:[#allocation7 + $0x50] sm:$0xff]
        %v348 = vld [vmem:[#allocation7 + $0x58] sm:$0xff]
        %v349 = vld [vmem:[#allocation7 + $0x60] sm:$0xff]
        %v350 = vld [vmem:[#allocation7 + $0x68] sm:$0xff]
        %v351 = vld [vmem:[#allocation7 + $0x70] sm:$0xff]
        %v352 = vld [vmem:[#allocation7 + $0x78] sm:$0xff]
        %v353 = vld [vmem:[#allocation7 + $0x80] sm:$0xff]
        %v354 = vld [vmem:[#allocation7 + $0x88] sm:$0xff]
        %v355 = vld [vmem:[#allocation7 + $0x90] sm:$0xff]
        %v356 = vld [vmem:[#allocation7 + $0x98] sm:$0xff]
        %v357 = vld [vmem:[#allocation7 + $0xa0] sm:$0xff]
        %v358 = vld [vmem:[#allocation7 + $0xa8] sm:$0xff]
        %v359 = vld [vmem:[#allocation7 + $0xb0] sm:$0xff]
        %v360 = vld [vmem:[#allocation7 + $0xb8] sm:$0xff]
        %v361 = vld [vmem:[#allocation7 + $0xc0] sm:$0xff]
        %v362 = vld [vmem:[#allocation7 + $0xc8] sm:$0xff]
        %v363 = vld [vmem:[#allocation7 + $0xd0] sm:$0xff]
        %v364 = vld [vmem:[#allocation7 + $0xd8] sm:$0xff]
        %v365 = vld [vmem:[#allocation7 + $0xe0] sm:$0xff]
        %v366 = vld [vmem:[#allocation7 + $0xe8] sm:$0xff]
        %v367 = vld [vmem:[#allocation7 + $0xf0] sm:$0xff]
        %v368 = vld [vmem:[#allocation7 + $0xf8] sm:$0xff]
        %v369 = vld [vmem:[%s3] sm:$0x3]
        %v371 = vlaneseq
        %v372 = vshrl.u32 %v371, 7
        %v373 = vsub.s32 0, %v372
        %v374 = vrot.slane %v369, %v373
        %v375 = vlaneseq
        %v376 = vshrl.u32 %v375, 7
        %v377 = vsub.s32 1, %v376
        %v378 = vrot.slane %v369, %v377
        %381 = vmatprep.subr.mxu0 %v338
        %382 = vmatpush1.msra.mxu0 %v337
        %383 = vmatprep.subr.mxu0 %v340
        %384 = vmatpush1.msra.mxu0 %v339
        %385 = vmatprep.subr.mxu0 %v342
        %386 = vmatpush1.msra.mxu0 %v341
        %387 = vmatprep.subr.mxu0 %v344
        %388 = vmatpush1.msra.mxu0 %v343
        %389 = vmatprep.subr.mxu0 %v346
        %390 = vmatpush1.msra.mxu0 %v345
        %391 = vmatprep.subr.mxu0 %v348
        %392 = vmatpush1.msra.mxu0 %v347
        %393 = vmatprep.subr.mxu0 %v350
        %394 = vmatpush1.msra.mxu0 %v349
        %395 = vmatprep.subr.mxu0 %v352
        %396 = vmatpush1.msra.mxu0 %v351
        %397 = vmatprep.subr.mxu0 %v354
        %398 = vmatpush1.msra.mxu0 %v353
        %399 = vmatprep.subr.mxu0 %v356
        %400 = vmatpush1.msra.mxu0 %v355
        %401 = vmatprep.subr.mxu0 %v358
        %402 = vmatpush1.msra.mxu0 %v357
        %403 = vmatprep.subr.mxu0 %v360
        %404 = vmatpush1.msra.mxu0 %v359
        %405 = vmatprep.subr.mxu0 %v362
        %406 = vmatpush1.msra.mxu0 %v361
        %407 = vmatprep.subr.mxu0 %v364
        %408 = vmatpush1.msra.mxu0 %v363
        %409 = vmatprep.subr.mxu0 %v366
        %410 = vmatpush1.msra.mxu0 %v365
        %411 = vmatprep.subr.mxu0 %v368
        %412 = vmatpush1.msra.mxu0 %v367
        %413 = vmatprep.subr.mxu0 0.0
        %414 = vmatpush1.msra.mxu0 0.0
        %415 = vmatprep.subr.mxu0 0.0
        %416 = vmatpush1.msra.mxu0 0.0
        %417 = vmatprep.subr.mxu0 0.0
        %418 = vmatpush1.msra.mxu0 0.0
        %419 = vmatprep.subr.mxu0 0.0
        %420 = vmatpush1.msra.mxu0 0.0
        %421 = vmatprep.subr.mxu0 0.0
        %422 = vmatpush1.msra.mxu0 0.0
        %423 = vmatprep.subr.mxu0 0.0
        %424 = vmatpush1.msra.mxu0 0.0
        %425 = vmatprep.subr.mxu0 0.0
        %426 = vmatpush1.msra.mxu0 0.0
        %427 = vmatprep.subr.mxu0 0.0
        %428 = vmatpush1.msra.mxu0 0.0
        %429 = vmatprep.subr.mxu0 0.0
        %430 = vmatpush1.msra.mxu0 0.0
        %431 = vmatprep.subr.mxu0 0.0
        %432 = vmatpush1.msra.mxu0 0.0
        %433 = vmatprep.subr.mxu0 0.0
        %434 = vmatpush1.msra.mxu0 0.0
        %435 = vmatprep.subr.mxu0 0.0
        %436 = vmatpush1.msra.mxu0 0.0
        %437 = vmatprep.subr.mxu0 0.0
        %438 = vmatpush1.msra.mxu0 0.0
        %439 = vmatprep.subr.mxu0 0.0
        %440 = vmatpush1.msra.mxu0 0.0
        %441 = vmatprep.subr.mxu0 0.0
        %442 = vmatpush1.msra.mxu0 0.0
        %443 = vmatprep.subr.mxu0 0.0
        %444 = vmatpush1.msra.mxu0 0.0
        %445 = vmatprep.mubr.f32.mxu0 0.0
        %446 = vmatmul.mubr.f32.gmra.mrb[0].mxu0 %v336
        %v447 = vpop.f32.mrb[0].mxu0
        %v448 = vadd.f32 %v374, %v447
        %v449 = vpop.f32.mrb[0].mxu0
        %v450 = vadd.f32 %v378, %v449
        %451 = vdwg.mxu0
        %v452 = vmax.f32 %v450, 0.0
        %v453 = vand.u32 2147483647, %v450
        %v454 = vsub.f32 0.0, %v453
        %v455 = vmul.f32 %v454, 1.442695
        %v456 = vpow.pop %v455
        %v457 = vadd.f32 %v456, 1.0
        %v458 = vlog2.pop %v457
        %v459 = vmul.f32 %v458, 0.6931472
        %v460 = vadd.f32 %v452, %v459
        %461 = vst [vmem:[%s321] sm:$0xff] %v448
        %462 = vst [vmem:[%s328] sm:$0xff] %v460
        %v463 = vld [vmem:[%s288] sm:$0xff]
        %v464 = vmul.f32 %v463, %v460
        %v465 = vadd.f32 %v448, %v464
        %466 = vst [vmem:[%s335] sm:$0xff] %v465
        %s467 = sand.u32 %s132, 1
        %s468 = scalar_lea.sflag [#allocation4], %s467
        %s469 = sand.u32 %s132, 1
        %s470 = smul.addr %s469, 8
        %s471 = scalar_lea.vmem [#allocation8], %s470
        %s472 = sand.u32 %s30, 1
        %s473 = scalar_lea.sflag [#allocation10], %s472
        %s474 = sand.u32 %s158, 1
        %s475 = smul.addr %s474, 8
        %s476 = scalar_lea.vmem [#allocation9], %s475
        %s477 = sand.u32 %s30, 1
        %s478 = scalar_lea.sflag [#allocation10], %s477
        %s479 = sand.u32 %s184, 1
        %s480 = smul.addr %s479, 8
        %s481 = scalar_lea.vmem [#allocation11], %s480
        // Predicated region
        $region49: #{tpu_custom_call.1} parent=35 // pred_check
          %p482 = pneg %p142
        $region50: #{tpu_custom_call.1} parent=35 // pred_check_branch
          %484 = sbr.rel (%p482) target = $region52
        $region51: #{tpu_custom_call.1} parent=35 // pred_region
          %s486 = ssub.s32 128, 128
          %487 = vsyncadd %s468, %s486
          %s488 = smul.addr %s30, 128
          %s489 = scalar_lea.hbm %s4, %s488
          %s491 = sshll.u32 %s471, 4
          %s492 = int_to_ptr.vmem [resolvable:$true] %s491
          %494 = dma.vmem_to_hbm [thread:$0]  %s492, 128, %s489, %s468
        $region52: #{tpu_custom_call.1} parent=35 // pred_fallthru
          _
        // Predicated region
        $region53: #{tpu_custom_call.1} parent=35 // pred_check
          %p495 = pneg %p168
        $region54: #{tpu_custom_call.1} parent=35 // pred_check_branch
          %497 = sbr.rel (%p495) target = $region56
        $region55: #{tpu_custom_call.1} parent=35 // pred_region
          %s499 = ssub.s32 128, 128
          %500 = vsyncadd %s473, %s499
          %s501 = smul.addr %s30, 128
          %s502 = scalar_lea.hbm %s5, %s501
          %s504 = sshll.u32 %s476, 4
          %s505 = int_to_ptr.vmem [resolvable:$true] %s504
          %507 = dma.vmem_to_hbm [thread:$0]  %s505, 128, %s502, %s473
        $region56: #{tpu_custom_call.1} parent=35 // pred_fallthru
          _
        // Predicated region
        $region57: #{tpu_custom_call.1} parent=35 // pred_check
          %p508 = pneg %p194
        $region58: #{tpu_custom_call.1} parent=35 // pred_check_branch
          %510 = sbr.rel (%p508) target = $region60
        $region59: #{tpu_custom_call.1} parent=35 // pred_region
          %s512 = ssub.s32 128, 128
          %513 = vsyncadd %s478, %s512
          %s514 = smul.addr %s30, 128
          %s515 = scalar_lea.hbm %s6, %s514
          %s517 = sshll.u32 %s481, 4
          %s518 = int_to_ptr.vmem [resolvable:$true] %s517
          %520 = dma.vmem_to_hbm [thread:$0]  %s518, 128, %s515, %s478
        $region60: #{tpu_custom_call.1} parent=35 // pred_fallthru
          _
      $region36: #{tpu_custom_call.1} parent=5 // pred_fallthru
        _
      %p521 = scmp.le.s32.totalorder 2, %s25
      // Predicated region
      $region61: #{tpu_custom_call.1} parent=5 // pred_check
        %p522 = pneg %p521
      $region62: #{tpu_custom_call.1} parent=5 // pred_check_branch
        %524 = sbr.rel (%p522) target = $region64
      $region63: #{tpu_custom_call.1} parent=5 // pred_region
        %s525 = ssub.s32 %s25, 2
        // Predicated region
        $region65: #{tpu_custom_call.1} parent=63 // pred_check
          %p526 = pneg %p148
        $region66: #{tpu_custom_call.1} parent=63 // pred_check_branch
          %528 = sbr.rel (%p526) target = $region68
        $region67: #{tpu_custom_call.1} parent=63 // pred_region
          %s529 = sand.u32 %s133, 1
          %s530 = scalar_lea.sflag [#allocation4], %s529
          %s531 = sand.u32 %s133, 1
          %s532 = smul.addr %s531, 8
          %s533 = scalar_lea.vmem [#allocation8], %s532
          %534 = dma.done %s530, 128
        $region68: #{tpu_custom_call.1} parent=63 // pred_fallthru
          _
        // Predicated region
        $region69: #{tpu_custom_call.1} parent=63 // pred_check
          %p535 = pneg %p174
        $region70: #{tpu_custom_call.1} parent=63 // pred_check_branch
          %537 = sbr.rel (%p535) target = $region72
        $region71: #{tpu_custom_call.1} parent=63 // pred_region
          %s538 = sand.u32 %s31, 1
          %s539 = scalar_lea.sflag [#allocation10], %s538
          %s540 = sand.u32 %s159, 1
          %s541 = smul.addr %s540, 8
          %s542 = scalar_lea.vmem [#allocation9], %s541
          %543 = dma.done %s539, 128
        $region72: #{tpu_custom_call.1} parent=63 // pred_fallthru
          _
        // Predicated region
        $region73: #{tpu_custom_call.1} parent=63 // pred_check
          %p544 = pneg %p200
        $region74: #{tpu_custom_call.1} parent=63 // pred_check_branch
          %546 = sbr.rel (%p544) target = $region76
        $region75: #{tpu_custom_call.1} parent=63 // pred_region
          %s547 = sand.u32 %s31, 1
          %s548 = scalar_lea.sflag [#allocation10], %s547
          %s549 = sand.u32 %s185, 1
          %s550 = smul.addr %s549, 8
          %s551 = scalar_lea.vmem [#allocation11], %s550
          %552 = dma.done %s548, 128
        $region76: #{tpu_custom_call.1} parent=63 // pred_fallthru
          _
      $region64: #{tpu_custom_call.1} parent=5 // pred_fallthru
        _
    $region6: #{tpu_custom_call.1} parent=1 // loop_footer
      %s29 = sadd.s32 1, %s25
    $region7: #{tpu_custom_call.1} parent=1 // loop_footer_branch
      %24 = sbr.rel target = $region3
    $region8: #{tpu_custom_call.1} parent=1 // loop_exit
      _
    %553 = vsyncpa [#allocation3], 1
    %s554 = scalar_lea.sflag [#allocation3], 1
    %555 = vsyncpa %s554, 1
    %556 = vsyncpa [#allocation6], 1
    %s557 = scalar_lea.sflag [#allocation6], 1
    %558 = vsyncpa %s557, 1
    %559 = vsyncpa [#allocation4], 1
    %s560 = scalar_lea.sflag [#allocation4], 1
    %561 = vsyncpa %s560, 1
    %562 = vsyncpa [#allocation10], 1
    %s563 = scalar_lea.sflag [#allocation10], 1
    %564 = vsyncpa %s563, 1

</llo_original>
